<compile_context>
chip_gen: v7x
topology: tpu7x:2x2x1
jax: 0.10.0
libtpu: 0.0.40
codegen_flags: <defaults>
</compile_context>

<pallas_src>
import jax
import jax.numpy as jnp
from jax.experimental import pallas as pl
from jax.experimental.pallas import tpu as pltpu

# ---- small, module-consistent dimensions ----
B = 16             # demo batch (module DataLoader uses small batches too)
S = 8              # sequence length (PyTorch uses max_length=128; small here)
H = 32             # "bert_dim" (hidden); real BERT-base is 768
H_EXT = 64         # H emb columns + 1 ones column (denom) + zero pad (clean MXU K)
TOPIC_DIM = 10
EMOTION_DIM = 10
TE_DIM = TOPIC_DIM + EMOTION_DIM
FUSION_HID = 128
NUM_CLASSES = 2
OUT_PAD = 128      # lane-dense output width
VOCAB = 100
VOCAB_PAD = 128    # vocab padded to a clean MXU contraction dim
BATCH_TILE = 8     # rows per grid step; raise to 128-256 for production batches


def early_fusion_kernel(ids_ref, mask_ref, te_ref, emb_ref,
                        pooler_w_ref, w1_ref, w2_ref, b2_ref, out_ref):
    bt, s = ids_ref.shape
    ids = ids_ref[...]                                            # (BT, S) int32
    mask = mask_ref[...]                                          # (BT, S) f32

    # ---- fused embedding gather + masked mean pool, routed through the MXU ----
    # count[b, v]  = sum_s mask[b, s] * [ids[b, s] == v]          (single vsel path)
    # count @ emb_ext = [ sum_s mask*emb[ids]  |  denom  |  0... ]
    vocab_iota = jax.lax.broadcasted_iota(jnp.int32, (bt, s, VOCAB_PAD), 2)
    count = jnp.sum(
        jnp.where(ids[:, :, None] == vocab_iota, mask[:, :, None], 0.0),
        axis=1)                                                   # (BT, VOCAB_PAD)
    ge = jnp.dot(count, emb_ref[...],
                 preferred_element_type=jnp.float32)              # (BT, H_EXT)

    denom = jnp.maximum(ge[:, H:H + 1], 1.0)                      # guard all-pad rows
    pooled_ext = ge * pl.reciprocal(denom, approx=True)           # (BT, H_EXT); col H ~ 1

    # ---- BERT pooler stand-in: dense (+bias folded as weight row H) + tanh ----
    bert_pooled = jnp.tanh(
        jnp.dot(pooled_ext, pooler_w_ref[...],
                preferred_element_type=jnp.float32))              # (BT, H)

    # ---- fused_features = cat([bert_pooled, topic, emotion]) @ W1 + b1 ----
    # One dot: LHS lanes [bert(0:32) | topic | emotion | 1 | 0-pad], weight rows match.
    fused = jnp.concatenate([bert_pooled, te_ref[...]], axis=1)   # (BT, 2H)
    h = jnp.maximum(
        jnp.dot(fused, w1_ref[...], preferred_element_type=jnp.float32),
        0.0)                                                      # (BT, 128), ReLU

    # ---- classifier, zero-padded to a lane-dense (BT, 128) output slab ----
    out_ref[...] = (jnp.dot(h, w2_ref[...], preferred_element_type=jnp.float32)
                    + b2_ref[...])                                # (BT, 128)


def early_fusion_forward(input_ids, attention_mask, topic_features, emotion_features, params):
    b = input_ids.shape[0]
    num_tiles = pl.cdiv(b, BATCH_TILE)
    b_pad = num_tiles * BATCH_TILE
    pad = b_pad - b

    ids = jnp.pad(input_ids.astype(jnp.int32), ((0, pad), (0, 0)))            # (b_pad, S)
    mask = jnp.pad(attention_mask.astype(jnp.float32), ((0, pad), (0, 0)))    # (b_pad, S)
    # topic | emotion | 1 (for the folded fusion bias) | zero pad -> H lanes
    te = jnp.concatenate(
        [topic_features.astype(jnp.float32),
         emotion_features.astype(jnp.float32),
         jnp.ones((b, 1), jnp.float32)], axis=1)                              # (b, 21)
    te_ext = jnp.pad(te, ((0, pad), (0, H - TE_DIM - 1)))                     # (b_pad, H)

    out = pl.pallas_call(
        early_fusion_kernel,
        out_shape=jax.ShapeDtypeStruct((b_pad, OUT_PAD), jnp.float32),
        grid=(num_tiles,),
        in_specs=[
            pl.BlockSpec((BATCH_TILE, S), lambda i: (i, 0)),          # ids
            pl.BlockSpec((BATCH_TILE, S), lambda i: (i, 0)),          # mask
            pl.BlockSpec((BATCH_TILE, H), lambda i: (i, 0)),          # te_ext
            pl.BlockSpec((VOCAB_PAD, H_EXT), lambda i: (0, 0)),       # emb_ext
            pl.BlockSpec((H_EXT, H), lambda i: (0, 0)),               # pooler_w_ext
            pl.BlockSpec((2 * H, FUSION_HID), lambda i: (0, 0)),      # w1_packed
            pl.BlockSpec((FUSION_HID, OUT_PAD), lambda i: (0, 0)),    # w2_pad
            pl.BlockSpec((1, OUT_PAD), lambda i: (0, 0)),             # b2_pad
        ],
        out_specs=pl.BlockSpec((BATCH_TILE, OUT_PAD), lambda i: (i, 0)),
        compiler_params=pltpu.CompilerParams(
            dimension_semantics=("parallel",)),
    )(ids, mask, te_ext, params["emb_ext"], params["pooler_w_ext"],
      params["w1_packed"], params["w2_pad"], params["b2_pad"])
    return out[:b, :NUM_CLASSES]


def init_params(key):
    """Deterministic init mimicking nn.Linear's U(-1/sqrt(fan_in), 1/sqrt(fan_in))."""
    def linear(key, fan_in, fan_out):
        kw, kb = jax.random.split(key)
        bound = 1.0 / jnp.sqrt(fan_in)
        w = jax.random.uniform(kw, (fan_in, fan_out), jnp.float32, -bound, bound)
        b = jax.random.uniform(kb, (1, fan_out), jnp.float32, -bound, bound)
        return w, b

    keys = jax.random.split(key, 4)

    # Embedding table padded to (VOCAB_PAD, H_EXT); column H is all ones so that
    # count @ emb_ext also emits the masked mean-pool denominator.
    emb = jax.random.normal(keys[0], (VOCAB, H), jnp.float32) * 0.02
    emb_ext = jnp.zeros((VOCAB_PAD, H_EXT), jnp.float32)
    emb_ext = emb_ext.at[:VOCAB, :H].set(emb)
    emb_ext = emb_ext.at[:, H].set(1.0)

    # Pooler dense (BERT pooler stand-in); bias folded as row H (fed by the ~1 lane).
    pooler_w, pooler_b = linear(keys[1], H, H)
    pooler_w_ext = jnp.zeros((H_EXT, H), jnp.float32)
    pooler_w_ext = pooler_w_ext.at[:H].set(pooler_w)
    pooler_w_ext = pooler_w_ext.at[H].set(pooler_b[0])

    # fusion_fc: (H + topic + emotion) -> 128, repacked for the single fused dot.
    # LHS lanes: [bert_pooled(0:H) | topic | emotion | 1 | 0-pad] -> 2H lanes.
    fusion_in = H + TE_DIM
    w1, b1 = linear(keys[2], fusion_in, FUSION_HID)
    w1_packed = jnp.zeros((2 * H, FUSION_HID), jnp.float32)
    w1_packed = w1_packed.at[:H].set(w1[:H])                       # bert rows
    w1_packed = w1_packed.at[H:H + TE_DIM].set(w1[H:])             # topic+emotion rows
    w1_packed = w1_packed.at[H + TE_DIM].set(b1[0])                # folded bias row

    # classifier, zero-padded to lane-dense (128, 128) / (1, 128).
    w2, b2 = linear(keys[3], FUSION_HID, NUM_CLASSES)
    w2_pad = jnp.pad(w2, ((0, 0), (0, OUT_PAD - NUM_CLASSES)))
    b2_pad = jnp.pad(b2, ((0, 0), (0, OUT_PAD - NUM_CLASSES)))

    return {
        "emb_ext": emb_ext,
        "pooler_w_ext": pooler_w_ext,
        "w1_packed": w1_packed,
        "w2_pad": w2_pad, "b2_pad": b2_pad,
    }


if __name__ == "__main__":
    key = jax.random.PRNGKey(0)
    k_ids, k_topic, k_emotion, k_params = jax.random.split(key, 4)

    input_ids = jax.random.randint(k_ids, (B, S), 0, VOCAB, dtype=jnp.int32)
    # last two positions of each sequence are padding
    attention_mask = jnp.concatenate(
        [jnp.ones((B, S - 2), jnp.int32), jnp.zeros((B, 2), jnp.int32)], axis=1)
    topic_features = jax.random.uniform(k_topic, (B, TOPIC_DIM), jnp.float32)
    emotion_features = jax.random.uniform(k_emotion, (B, EMOTION_DIM), jnp.float32)

    params = init_params(k_params)

    logits = early_fusion_forward(input_ids, attention_mask,
                                  topic_features, emotion_features, params)
    jax.block_until_ready(logits)
    assert logits.shape == (B, NUM_CLASSES)
    assert bool(jnp.all(jnp.isfinite(logits)))
    print("KERNEL_OK")
</pallas_src>

<mosaic_0001>
module attributes {stable_mosaic.version = 11 : i64} {
  func.func @early_fusion_kernel(%arg0: i32, %arg1: memref<8x8xi32, #tpu.memory_space<vmem>>, %arg2: memref<8x8xf32, #tpu.memory_space<vmem>>, %arg3: memref<8x32xf32, #tpu.memory_space<vmem>>, %arg4: memref<128x64xf32, #tpu.memory_space<vmem>>, %arg5: memref<64x32xf32, #tpu.memory_space<vmem>>, %arg6: memref<64x128xf32, #tpu.memory_space<vmem>>, %arg7: memref<128x128xf32, #tpu.memory_space<vmem>>, %arg8: memref<1x128xf32, #tpu.memory_space<vmem>>, %arg9: memref<8x128xf32, #tpu.memory_space<vmem>>) attributes {dimension_semantics = [#tpu.dimension_semantics<parallel>], iteration_bounds = array<i64: 2>, scalar_prefetch = 0 : i64, scratch_operands = 0 : i64, tpu.core_type = #tpu.core_type<tc>, window_params = [{transform_indices = @transform_0, window_bounds = array<i64: 8, 8>}, {transform_indices = @transform_1, window_bounds = array<i64: 8, 8>}, {transform_indices = @transform_2, window_bounds = array<i64: 8, 32>}, {pipeline_mode = #tpu.pipeline_mode<synchronous>, transform_indices = @transform_3, window_bounds = array<i64: 128, 64>}, {pipeline_mode = #tpu.pipeline_mode<synchronous>, transform_indices = @transform_4, window_bounds = array<i64: 64, 32>}, {pipeline_mode = #tpu.pipeline_mode<synchronous>, transform_indices = @transform_5, window_bounds = array<i64: 64, 128>}, {pipeline_mode = #tpu.pipeline_mode<synchronous>, transform_indices = @transform_6, window_bounds = array<i64: 128, 128>}, {pipeline_mode = #tpu.pipeline_mode<synchronous>, transform_indices = @transform_7, window_bounds = array<i64: 1, 128>}, {transform_indices = @transform_8, window_bounds = array<i64: 8, 128>}]} {
    %c0 = arith.constant 0 : index
    %c0_0 = arith.constant 0 : index
    %0 = vector.load %arg1[%c0, %c0_0] : memref<8x8xi32, #tpu.memory_space<vmem>>, vector<8x8xi32>
    %c0_1 = arith.constant 0 : index
    %c0_2 = arith.constant 0 : index
    %1 = vector.load %arg2[%c0_1, %c0_2] : memref<8x8xf32, #tpu.memory_space<vmem>>, vector<8x8xf32>
    %2 = tpu.iota {dimensions = array<i32: 2>} : vector<8x8x128xi32>
    %3 = vector.shape_cast %0 : vector<8x8xi32> to vector<8x8x1xi32>
    %4 = vector.broadcast %3 : vector<8x8x1xi32> to vector<8x8x128xi32>
    %5 = arith.cmpi eq, %4, %2 : vector<8x8x128xi32>
    %6 = vector.shape_cast %1 : vector<8x8xf32> to vector<8x8x1xf32>
    %cst = arith.constant 0.000000e+00 : f32
    %7 = vector.shape_cast %6 : vector<8x8x1xf32> to vector<8x8x1xf32>
    %8 = vector.broadcast %7 : vector<8x8x1xf32> to vector<8x8x128xf32>
    %9 = vector.broadcast %cst : f32 to vector<8x8x128xf32>
    %10 = arith.select %5, %8, %9 : vector<8x8x128xi1>, vector<8x8x128xf32>
    %cst_3 = arith.constant dense<0.000000e+00> : vector<8x128xf32>
    %11 = vector.multi_reduction <add>, %10, %cst_3 [1] : vector<8x8x128xf32> to vector<8x128xf32>
    %c0_4 = arith.constant 0 : index
    %c0_5 = arith.constant 0 : index
    %12 = vector.load %arg4[%c0_4, %c0_5] : memref<128x64xf32, #tpu.memory_space<vmem>>, vector<128x64xf32>
    %cst_6 = arith.constant dense<0.000000e+00> : vector<8x64xf32>
    %13 = tpu.matmul %11, %12, %cst_6 {dimension_numbers = #tpu.dot_dimension_numbers<[1], [0], [0], [1], [0, 0, 1, 1], [], []>} : vector<8x128xf32>, vector<128x64xf32>, vector<8x64xf32> -> vector<8x64xf32>
    %14 = vector.extract_strided_slice %13 {offsets = [0, 32], sizes = [8, 1], strides = [1, 1]} : vector<8x64xf32> to vector<8x1xf32>
    %cst_7 = arith.constant 1.000000e+00 : f32
    %15 = vector.broadcast %cst_7 : f32 to vector<8x1xf32>
    %16 = arith.maximumf %14, %15 : vector<8x1xf32>
    %17 = tpu.reciprocal %16 {approx = true} : vector<8x1xf32> -> vector<8x1xf32>
    %18 = vector.broadcast %17 : vector<8x1xf32> to vector<8x64xf32>
    %19 = arith.mulf %13, %18 : vector<8x64xf32>
    %c0_8 = arith.constant 0 : index
    %c0_9 = arith.constant 0 : index
    %20 = vector.load %arg5[%c0_8, %c0_9] : memref<64x32xf32, #tpu.memory_space<vmem>>, vector<64x32xf32>
    %cst_10 = arith.constant dense<0.000000e+00> : vector<8x32xf32>
    %21 = tpu.matmul %19, %20, %cst_10 {dimension_numbers = #tpu.dot_dimension_numbers<[1], [0], [0], [1], [0, 0, 1, 1], [], []>} : vector<8x64xf32>, vector<64x32xf32>, vector<8x32xf32> -> vector<8x32xf32>
    %22 = math.tanh %21 : vector<8x32xf32>
    %c0_11 = arith.constant 0 : index
    %c0_12 = arith.constant 0 : index
    %23 = vector.load %arg3[%c0_11, %c0_12] : memref<8x32xf32, #tpu.memory_space<vmem>>, vector<8x32xf32>
    %24 = tpu.concatenate %22, %23 in 1 : vector<8x32xf32>, vector<8x32xf32> -> vector<8x64xf32>
    %c0_13 = arith.constant 0 : index
    %c0_14 = arith.constant 0 : index
    %25 = vector.load %arg6[%c0_13, %c0_14] : memref<64x128xf32, #tpu.memory_space<vmem>>, vector<64x128xf32>
    %cst_15 = arith.constant dense<0.000000e+00> : vector<8x128xf32>
    %26 = tpu.matmul %24, %25, %cst_15 {dimension_numbers = #tpu.dot_dimension_numbers<[1], [0], [0], [1], [0, 0, 1, 1], [], []>} : vector<8x64xf32>, vector<64x128xf32>, vector<8x128xf32> -> vector<8x128xf32>
    %cst_16 = arith.constant 0.000000e+00 : f32
    %27 = vector.broadcast %cst_16 : f32 to vector<8x128xf32>
    %28 = arith.maximumf %26, %27 : vector<8x128xf32>
    %c0_17 = arith.constant 0 : index
    %c0_18 = arith.constant 0 : index
    %29 = vector.load %arg7[%c0_17, %c0_18] : memref<128x128xf32, #tpu.memory_space<vmem>>, vector<128x128xf32>
    %cst_19 = arith.constant dense<0.000000e+00> : vector<8x128xf32>
    %30 = tpu.matmul %28, %29, %cst_19 {dimension_numbers = #tpu.dot_dimension_numbers<[1], [0], [0], [1], [0, 0, 1, 1], [], []>} : vector<8x128xf32>, vector<128x128xf32>, vector<8x128xf32> -> vector<8x128xf32>
    %c0_20 = arith.constant 0 : index
    %c0_21 = arith.constant 0 : index
    %31 = vector.load %arg8[%c0_20, %c0_21] : memref<1x128xf32, #tpu.memory_space<vmem>>, vector<1x128xf32>
    %32 = vector.broadcast %31 : vector<1x128xf32> to vector<8x128xf32>
    %33 = arith.addf %30, %32 : vector<8x128xf32>
    %c0_22 = arith.constant 0 : index
    %c0_23 = arith.constant 0 : index
    %34 = vector.load %arg9[%c0_22, %c0_23] : memref<8x128xf32, #tpu.memory_space<vmem>>, vector<8x128xf32>
    tpu.vector_store %arg9[%c0_22, %c0_23], %33 {strides = array<i32>} : memref<8x128xf32, #tpu.memory_space<vmem>>, vector<8x128xf32>,
    return
  }
  func.func @transform_0(%arg0: i32) -> (i32, i32) {
    %c0_i32 = arith.constant 0 : i32
    %c0_i32_0 = arith.constant 0 : i32
    return %arg0, %c0_i32 : i32, i32
  }
  func.func @transform_1(%arg0: i32) -> (i32, i32) {
    %c0_i32 = arith.constant 0 : i32
    %c0_i32_0 = arith.constant 0 : i32
    return %arg0, %c0_i32 : i32, i32
  }
  func.func @transform_2(%arg0: i32) -> (i32, i32) {
    %c0_i32 = arith.constant 0 : i32
    %c0_i32_0 = arith.constant 0 : i32
    return %arg0, %c0_i32 : i32, i32
  }
  func.func @transform_3(%arg0: i32) -> (i32, i32) {
    %c0_i32 = arith.constant 0 : i32
    %c0_i32_0 = arith.constant 0 : i32
    %c0_i32_1 = arith.constant 0 : i32
    return %c0_i32, %c0_i32_0 : i32, i32
  }
  func.func @transform_4(%arg0: i32) -> (i32, i32) {
    %c0_i32 = arith.constant 0 : i32
    %c0_i32_0 = arith.constant 0 : i32
    %c0_i32_1 = arith.constant 0 : i32
    return %c0_i32, %c0_i32_0 : i32, i32
  }
  func.func @transform_5(%arg0: i32) -> (i32, i32) {
    %c0_i32 = arith.constant 0 : i32
    %c0_i32_0 = arith.constant 0 : i32
    %c0_i32_1 = arith.constant 0 : i32
    return %c0_i32, %c0_i32_0 : i32, i32
  }
  func.func @transform_6(%arg0: i32) -> (i32, i32) {
    %c0_i32 = arith.constant 0 : i32
    %c0_i32_0 = arith.constant 0 : i32
    %c0_i32_1 = arith.constant 0 : i32
    return %c0_i32, %c0_i32_0 : i32, i32
  }
  func.func @transform_7(%arg0: i32) -> (i32, i32) {
    %c0_i32 = arith.constant 0 : i32
    %c0_i32_0 = arith.constant 0 : i32
    %c0_i32_1 = arith.constant 0 : i32
    return %c0_i32, %c0_i32_0 : i32, i32
  }
  func.func @transform_8(%arg0: i32) -> (i32, i32) {
    %c0_i32 = arith.constant 0 : i32
    %c0_i32_0 = arith.constant 0 : i32
    return %arg0, %c0_i32 : i32, i32
  }
}

</mosaic_0001>

<llo_original>
// kernel: tpu_custom_call.1
$region0: #{tpu_custom_call.1}
  #allocation0 [shape = 'u32[]', space=smem, size = 0x4, offset = 0x4, fixed_abs, tag = 'smem constant byte address 0x4 - core index']
  #allocation1 [shape = 'u32[144,128]{1,0:T(1,128)}', space=vmem, size = 0x12000, scoped, tag = 'internal scratch']
  %s0 = inlined_call_operand.vmem [shape: s32[16,8], index: 0, kind: input, shape index: {}]
  %s1 = inlined_call_operand.vmem [shape: f32[16,8], index: 1, kind: input, shape index: {}]
  %s2 = inlined_call_operand.vmem [shape: f32[16,32], index: 2, kind: input, shape index: {}]
  %s3 = inlined_call_operand.vmem [shape: f32[128,64], index: 3, kind: input, shape index: {}]
  %s4 = inlined_call_operand.vmem [shape: f32[64,32], index: 4, kind: input, shape index: {}]
  %s5 = inlined_call_operand.vmem [shape: f32[64,128], index: 5, kind: input, shape index: {}]
  %s6 = inlined_call_operand.vmem [shape: f32[128,128], index: 6, kind: input, shape index: {}]
  %s7 = inlined_call_operand.vmem [shape: f32[1,128], index: 7, kind: input, shape index: {}]
  %s8 = inlined_call_operand.hbm [shape: f32[16,128], index: 8, kind: output, shape index: {}]
  %s9 = sld [smem:[#allocation0]]
  $region65: #{tpu_custom_call.1} parent=0
    _
  %s11 = ssub.s32 1, %s9
  %s12 = scalar_select 0, %s11, %s9
  $region1: #{tpu_custom_call.1} parent=0
    #allocation2 [shape = 'u8[8192]{0}', space=vmem, size = 0x2000, scoped, tag = 'output window, operand 0']
    #allocation3 [shape = 's32[2]{0}', space=sflag, size = 0x8, scoped, tag = 'scoped memory for tpu_custom_call.1']
    %13 = vsyncpa [#allocation3], 0
    %s14 = scalar_lea.sflag [#allocation3], 1
    %15 = vsyncpa %s14, 0
    loop: start=0, step=1, limit=4
    $region2: #{tpu_custom_call.1} parent=1 // loop_pre_header
      _
    $region3: #{tpu_custom_call.1} parent=1 // loop_header
      %s17 = sphi 0, %s21
      %p18 = scmp.ge.s32.totalorder %s17, 4
      %s27 = sphi 0, %s29
      %s30 = sphi 0, %s27
      %s31 = sphi 0, %s30
      %s47 = sphi 0, %s31
      %s53 = sphi 0, %s55
      %s56 = sphi 0, %s53
      %s57 = sphi 0, %s56
      %s73 = sphi 0, %s57
      %s79 = sphi 0, %s81
      %s82 = sphi 0, %s79
      %s83 = sphi 0, %s82
      %s99 = sphi 0, %s83
      %s103 = sphi 0, %s103
      %s105 = sphi 0, %s103
      %s106 = sphi 0, %s105
      %s120 = sphi 0, %s106
      %s124 = sphi 0, %s124
      %s126 = sphi 0, %s124
      %s127 = sphi 0, %s126
      %s141 = sphi 0, %s127
      %s145 = sphi 0, %s145
      %s147 = sphi 0, %s145
      %s148 = sphi 0, %s147
      %s162 = sphi 0, %s148
      %s166 = sphi 0, %s166
      %s168 = sphi 0, %s166
      %s169 = sphi 0, %s168
      %s183 = sphi 0, %s169
      %s187 = sphi 0, %s187
      %s189 = sphi 0, %s187
      %s190 = sphi 0, %s189
      %s204 = sphi 0, %s190
      %s210 = sphi 0, %s212
      %s213 = sphi 0, %s210
      %s214 = sphi 0, %s213
      %s230 = sphi 0, %s214
    $region4: #{tpu_custom_call.1} parent=1 // loop_header_branch
      %20 = sbr.rel (%p18) target = $region8
    $region5: #{tpu_custom_call.1} parent=1 // loop_body
      %s22 = ssub.s32 %s17, 1
      %s23 = ssub.s32 %s17, 2
      %s24 = sadd.s32 %s17, 1
      %s25 = ssub.s32 %s17, %s24
      %p26 = scmp.eq.s32.totalorder %s25, 0
      %s28 = sadd.s32 %s27, 1
      %s29 = scalar_select %p26, %s27, %s28
      %p32 = pneg %p26
      %p33 = scmp.eq.s32.totalorder %s17, 1
      %p34 = por %p32, %p33
      %p35 = scmp.ne.s32.totalorder %s27, %s30
      %p36 = scmp.eq.s32.totalorder %s17, 0
      %p37 = por %p35, %p36
      %p38 = scmp.ne.s32.totalorder %s27, %s30
      %p39 = scmp.eq.s32.totalorder %s22, 1
      %p40 = por %p38, %p39
      %p41 = scmp.ne.s32.totalorder %s30, %s31
      %p42 = scmp.eq.s32.totalorder %s22, 0
      %p43 = por %p41, %p42
      %p44 = scmp.ne.s32.totalorder %s30, %s31
      %p45 = scmp.eq.s32.totalorder %s23, 1
      %p46 = por %p44, %p45
      %p48 = scmp.ne.s32.totalorder %s31, %s47
      %p49 = scmp.eq.s32.totalorder %s23, 0
      %p50 = por %p48, %p49
      %s51 = ssub.s32 %s17, %s24
      %p52 = scmp.eq.s32.totalorder %s51, 0
      %s54 = sadd.s32 %s53, 1
      %s55 = scalar_select %p52, %s53, %s54
      %p58 = pneg %p52
      %p59 = scmp.eq.s32.totalorder %s17, 1
      %p60 = por %p58, %p59
      %p61 = scmp.ne.s32.totalorder %s53, %s56
      %p62 = scmp.eq.s32.totalorder %s17, 0
      %p63 = por %p61, %p62
      %p64 = scmp.ne.s32.totalorder %s53, %s56
      %p65 = scmp.eq.s32.totalorder %s22, 1
      %p66 = por %p64, %p65
      %p67 = scmp.ne.s32.totalorder %s56, %s57
      %p68 = scmp.eq.s32.totalorder %s22, 0
      %p69 = por %p67, %p68
      %p70 = scmp.ne.s32.totalorder %s56, %s57
      %p71 = scmp.eq.s32.totalorder %s23, 1
      %p72 = por %p70, %p71
      %p74 = scmp.ne.s32.totalorder %s57, %s73
      %p75 = scmp.eq.s32.totalorder %s23, 0
      %p76 = por %p74, %p75
      %s77 = ssub.s32 %s17, %s24
      %p78 = scmp.eq.s32.totalorder %s77, 0
      %s80 = sadd.s32 %s79, 1
      %s81 = scalar_select %p78, %s79, %s80
      %p84 = pneg %p78
      %p85 = scmp.eq.s32.totalorder %s17, 1
      %p86 = por %p84, %p85
      %p87 = scmp.ne.s32.totalorder %s79, %s82
      %p88 = scmp.eq.s32.totalorder %s17, 0
      %p89 = por %p87, %p88
      %p90 = scmp.ne.s32.totalorder %s79, %s82
      %p91 = scmp.eq.s32.totalorder %s22, 1
      %p92 = por %p90, %p91
      %p93 = scmp.ne.s32.totalorder %s82, %s83
      %p94 = scmp.eq.s32.totalorder %s22, 0
      %p95 = por %p93, %p94
      %p96 = scmp.ne.s32.totalorder %s82, %s83
      %p97 = scmp.eq.s32.totalorder %s23, 1
      %p98 = por %p96, %p97
      %p100 = scmp.ne.s32.totalorder %s83, %s99
      %p101 = scmp.eq.s32.totalorder %s23, 0
      %p102 = por %p100, %p101
      %s104 = sadd.s32 %s103, 1
      %p107 = scmp.eq.s32.totalorder %s17, 1
      %p108 = scmp.ne.s32.totalorder %s103, %s105
      %p109 = scmp.eq.s32.totalorder %s17, 0
      %p110 = por %p108, %p109
      %p111 = scmp.ne.s32.totalorder %s103, %s105
      %p112 = scmp.eq.s32.totalorder %s22, 1
      %p113 = por %p111, %p112
      %p114 = scmp.ne.s32.totalorder %s105, %s106
      %p115 = scmp.eq.s32.totalorder %s22, 0
      %p116 = por %p114, %p115
      %p117 = scmp.ne.s32.totalorder %s105, %s106
      %p118 = scmp.eq.s32.totalorder %s23, 1
      %p119 = por %p117, %p118
      %p121 = scmp.ne.s32.totalorder %s106, %s120
      %p122 = scmp.eq.s32.totalorder %s23, 0
      %p123 = por %p121, %p122
      %s125 = sadd.s32 %s124, 1
      %p128 = scmp.eq.s32.totalorder %s17, 1
      %p129 = scmp.ne.s32.totalorder %s124, %s126
      %p130 = scmp.eq.s32.totalorder %s17, 0
      %p131 = por %p129, %p130
      %p132 = scmp.ne.s32.totalorder %s124, %s126
      %p133 = scmp.eq.s32.totalorder %s22, 1
      %p134 = por %p132, %p133
      %p135 = scmp.ne.s32.totalorder %s126, %s127
      %p136 = scmp.eq.s32.totalorder %s22, 0
      %p137 = por %p135, %p136
      %p138 = scmp.ne.s32.totalorder %s126, %s127
      %p139 = scmp.eq.s32.totalorder %s23, 1
      %p140 = por %p138, %p139
      %p142 = scmp.ne.s32.totalorder %s127, %s141
      %p143 = scmp.eq.s32.totalorder %s23, 0
      %p144 = por %p142, %p143
      %s146 = sadd.s32 %s145, 1
      %p149 = scmp.eq.s32.totalorder %s17, 1
      %p150 = scmp.ne.s32.totalorder %s145, %s147
      %p151 = scmp.eq.s32.totalorder %s17, 0
      %p152 = por %p150, %p151
      %p153 = scmp.ne.s32.totalorder %s145, %s147
      %p154 = scmp.eq.s32.totalorder %s22, 1
      %p155 = por %p153, %p154
      %p156 = scmp.ne.s32.totalorder %s147, %s148
      %p157 = scmp.eq.s32.totalorder %s22, 0
      %p158 = por %p156, %p157
      %p159 = scmp.ne.s32.totalorder %s147, %s148
      %p160 = scmp.eq.s32.totalorder %s23, 1
      %p161 = por %p159, %p160
      %p163 = scmp.ne.s32.totalorder %s148, %s162
      %p164 = scmp.eq.s32.totalorder %s23, 0
      %p165 = por %p163, %p164
      %s167 = sadd.s32 %s166, 1
      %p170 = scmp.eq.s32.totalorder %s17, 1
      %p171 = scmp.ne.s32.totalorder %s166, %s168
      %p172 = scmp.eq.s32.totalorder %s17, 0
      %p173 = por %p171, %p172
      %p174 = scmp.ne.s32.totalorder %s166, %s168
      %p175 = scmp.eq.s32.totalorder %s22, 1
      %p176 = por %p174, %p175
      %p177 = scmp.ne.s32.totalorder %s168, %s169
      %p178 = scmp.eq.s32.totalorder %s22, 0
      %p179 = por %p177, %p178
      %p180 = scmp.ne.s32.totalorder %s168, %s169
      %p181 = scmp.eq.s32.totalorder %s23, 1
      %p182 = por %p180, %p181
      %p184 = scmp.ne.s32.totalorder %s169, %s183
      %p185 = scmp.eq.s32.totalorder %s23, 0
      %p186 = por %p184, %p185
      %s188 = sadd.s32 %s187, 1
      %p191 = scmp.eq.s32.totalorder %s17, 1
      %p192 = scmp.ne.s32.totalorder %s187, %s189
      %p193 = scmp.eq.s32.totalorder %s17, 0
      %p194 = por %p192, %p193
      %p195 = scmp.ne.s32.totalorder %s187, %s189
      %p196 = scmp.eq.s32.totalorder %s22, 1
      %p197 = por %p195, %p196
      %p198 = scmp.ne.s32.totalorder %s189, %s190
      %p199 = scmp.eq.s32.totalorder %s22, 0
      %p200 = por %p198, %p199
      %p201 = scmp.ne.s32.totalorder %s189, %s190
      %p202 = scmp.eq.s32.totalorder %s23, 1
      %p203 = por %p201, %p202
      %p205 = scmp.ne.s32.totalorder %s190, %s204
      %p206 = scmp.eq.s32.totalorder %s23, 0
      %p207 = por %p205, %p206
      %s208 = ssub.s32 %s17, %s24
      %p209 = scmp.eq.s32.totalorder %s208, 0
      %s211 = sadd.s32 %s210, 1
      %s212 = scalar_select %p209, %s210, %s211
      %p215 = pneg %p209
      %p216 = scmp.eq.s32.totalorder %s17, 1
      %p217 = por %p215, %p216
      %p218 = scmp.ne.s32.totalorder %s210, %s213
      %p219 = scmp.eq.s32.totalorder %s17, 0
      %p220 = por %p218, %p219
      %p221 = scmp.ne.s32.totalorder %s210, %s213
      %p222 = scmp.eq.s32.totalorder %s22, 1
      %p223 = por %p221, %p222
      %p224 = scmp.ne.s32.totalorder %s213, %s214
      %p225 = scmp.eq.s32.totalorder %s22, 0
      %p226 = por %p224, %p225
      %p227 = scmp.ne.s32.totalorder %s213, %s214
      %p228 = scmp.eq.s32.totalorder %s23, 1
      %p229 = por %p227, %p228
      %p231 = scmp.ne.s32.totalorder %s214, %s230
      %p232 = scmp.eq.s32.totalorder %s23, 0
      %p233 = por %p231, %p232
      %p234 = scmp.le.s32.totalorder 1, %s17
      %p235 = scmp.lt.s32.totalorder %s17, 3
      %p236 = pnand %p234, %p235
      %p237 = pneg %p236
      // Predicated region
      $region9: #{tpu_custom_call.1} parent=5 // pred_check
        _
      $region10: #{tpu_custom_call.1} parent=5 // pred_check_branch
        %239 = sbr.rel (%p236) target = $region12
      $region11: #{tpu_custom_call.1} parent=5 // pred_region
        %s240 = ssub.s32 %s17, 1
        // Predicated region
        $region13: #{tpu_custom_call.1} parent=11 // pred_check
          %p241 = pneg %p116
        $region14: #{tpu_custom_call.1} parent=11 // pred_check_branch
          %243 = sbr.rel (%p241) target = $region16
        $region15: #{tpu_custom_call.1} parent=11 // pred_region
          _
        $region16: #{tpu_custom_call.1} parent=11 // pred_fallthru
          _
        // Predicated region
        $region17: #{tpu_custom_call.1} parent=11 // pred_check
          %p244 = pneg %p137
        $region18: #{tpu_custom_call.1} parent=11 // pred_check_branch
          %246 = sbr.rel (%p244) target = $region20
        $region19: #{tpu_custom_call.1} parent=11 // pred_region
          _
        $region20: #{tpu_custom_call.1} parent=11 // pred_fallthru
          _
        // Predicated region
        $region21: #{tpu_custom_call.1} parent=11 // pred_check
          %p247 = pneg %p158
        $region22: #{tpu_custom_call.1} parent=11 // pred_check_branch
          %249 = sbr.rel (%p247) target = $region24
        $region23: #{tpu_custom_call.1} parent=11 // pred_region
          _
        $region24: #{tpu_custom_call.1} parent=11 // pred_fallthru
          _
        // Predicated region
        $region25: #{tpu_custom_call.1} parent=11 // pred_check
          %p250 = pneg %p179
        $region26: #{tpu_custom_call.1} parent=11 // pred_check_branch
          %252 = sbr.rel (%p250) target = $region28
        $region27: #{tpu_custom_call.1} parent=11 // pred_region
          _
        $region28: #{tpu_custom_call.1} parent=11 // pred_fallthru
          _
        // Predicated region
        $region29: #{tpu_custom_call.1} parent=11 // pred_check
          %p253 = pneg %p200
        $region30: #{tpu_custom_call.1} parent=11 // pred_check_branch
          %255 = sbr.rel (%p253) target = $region32
        $region31: #{tpu_custom_call.1} parent=11 // pred_region
          _
        $region32: #{tpu_custom_call.1} parent=11 // pred_fallthru
          _
      $region12: #{tpu_custom_call.1} parent=5 // pred_fallthru
        _
      %p256 = scmp.lt.s32.totalorder %s17, 2
      // Predicated region
      $region33: #{tpu_custom_call.1} parent=5 // pred_check
        %p257 = pneg %p256
      $region34: #{tpu_custom_call.1} parent=5 // pred_check_branch
        %259 = sbr.rel (%p257) target = $region36
      $region35: #{tpu_custom_call.1} parent=5 // pred_region
        // Predicated region
        $region37: #{tpu_custom_call.1} parent=35 // pred_check
          %p260 = pneg %p37
        $region38: #{tpu_custom_call.1} parent=35 // pred_check_branch
          %262 = sbr.rel (%p260) target = $region40
        $region39: #{tpu_custom_call.1} parent=35 // pred_region
          %p263 = scmp.lt.s32.totalorder %s17, 1
          %s264 = scalar_select %p263, %s17, 1
          %s265 = smul.addr %s264, 8
          %s266 = scalar_lea.vmem %s0, %s265
        $region40: #{tpu_custom_call.1} parent=35 // pred_fallthru
          _
        // Predicated region
        $region41: #{tpu_custom_call.1} parent=35 // pred_check
          %p267 = pneg %p63
        $region42: #{tpu_custom_call.1} parent=35 // pred_check_branch
          %269 = sbr.rel (%p267) target = $region44
        $region43: #{tpu_custom_call.1} parent=35 // pred_region
          %p270 = scmp.lt.s32.totalorder %s17, 1
          %s271 = scalar_select %p270, %s17, 1
          %s272 = smul.addr %s271, 8
          %s273 = scalar_lea.vmem %s1, %s272
        $region44: #{tpu_custom_call.1} parent=35 // pred_fallthru
          _
        // Predicated region
        $region45: #{tpu_custom_call.1} parent=35 // pred_check
          %p274 = pneg %p89
        $region46: #{tpu_custom_call.1} parent=35 // pred_check_branch
          %276 = sbr.rel (%p274) target = $region48
        $region47: #{tpu_custom_call.1} parent=35 // pred_region
          %p277 = scmp.lt.s32.totalorder %s17, 1
          %s278 = scalar_select %p277, %s17, 1
          %s279 = smul.addr %s278, 8
          %s280 = scalar_lea.vmem %s2, %s279
        $region48: #{tpu_custom_call.1} parent=35 // pred_fallthru
          _
      $region36: #{tpu_custom_call.1} parent=5 // pred_fallthru
        _
      %p281 = scmp.le.s32.totalorder 1, %s17
      %p282 = scmp.lt.s32.totalorder %s17, 3
      %p283 = pnand %p281, %p282
      %p284 = pneg %p283
      // Predicated region
      $region49: #{tpu_custom_call.1} parent=5 // pred_check
        _
      $region50: #{tpu_custom_call.1} parent=5 // pred_check_branch
        %286 = sbr.rel (%p283) target = $region52
      $region51: #{tpu_custom_call.1} parent=5 // pred_region
        %s287 = ssub.s32 %s17, 1
        %p288 = scmp.lt.s32.totalorder %s22, 1
        %s289 = scalar_select %p288, %s22, 1
        %s290 = smul.addr %s289, 8
        %s291 = scalar_lea.vmem %s0, %s290
        %p292 = pneg %p43
        %p293 = pneg %p40
        %p294 = scmp.lt.s32.totalorder %s22, 1
        %s295 = scalar_select %p294, %s22, 1
        %s296 = smul.addr %s295, 8
        %s297 = scalar_lea.vmem %s1, %s296
        %p298 = pneg %p69
        %p299 = pneg %p66
        %p300 = scmp.lt.s32.totalorder %s22, 1
        %s301 = scalar_select %p300, %s22, 1
        %s302 = smul.addr %s301, 8
        %s303 = scalar_lea.vmem %s2, %s302
        %p304 = pneg %p95
        %p305 = pneg %p92
        %p306 = pneg %p116
        %p307 = pneg %p113
        %p308 = pneg %p137
        %p309 = pneg %p134
        %p310 = pneg %p158
        %p311 = pneg %p155
        %p312 = pneg %p179
        %p313 = pneg %p176
        %p314 = pneg %p200
        %p315 = pneg %p197
        %p316 = pneg %p226
        %p317 = pneg %p223
        %s318 = sand.u32 %s213, 1
        %s319 = scalar_lea.sflag [#allocation3], %s318
        %s320 = sand.u32 %s213, 1
        %s321 = smul.addr %s320, 8
        %s322 = scalar_lea.vmem [#allocation2], %s321
        %p323 = scmp.lt.s32.totalorder %s22, 1
        %s324 = scalar_select %p323, %s22, 1
        %s325 = smul.addr %s324, 8
        %s326 = scalar_lea.vmem %s0, %s325
        %p327 = scmp.lt.s32.totalorder %s22, 1
        %s328 = scalar_select %p327, %s22, 1
        %s329 = smul.addr %s328, 8
        %s330 = scalar_lea.vmem %s1, %s329
        %p331 = scmp.lt.s32.totalorder %s22, 1
        %s332 = scalar_select %p331, %s22, 1
        %s333 = smul.addr %s332, 8
        %s334 = scalar_lea.vmem %s2, %s333
        %v335 = vld [vmem:[%s326] sm:$0xff]
        %v336 = vld [vmem:[%s330] sm:$0xff]
        %v337 = vlaneseq
        %v338 = vand.u32 %v337, 127
        %v339 = vlaneseq
        %v340 = vshrl.u32 %v339, 7
        %v341 = vsub.s32 0, %v340
        %v342 = vrot.slane %v335, %v341
        %344 = vbcast.lane.b32.xlu0 %v342, 256
        %v345 = vpop.permute.xlu0 %344
        %v346 = vlaneseq
        %v347 = vshrl.u32 %v346, 7
        %v348 = vsub.s32 1, %v347
        %v349 = vrot.slane %v335, %v348
        %351 = vbcast.lane.b32.xlu0 %v349, 256
        %v352 = vpop.permute.xlu0 %351
        %v353 = vlaneseq
        %v354 = vshrl.u32 %v353, 7
        %v355 = vsub.s32 2, %v354
        %v356 = vrot.slane %v335, %v355
        %358 = vbcast.lane.b32.xlu0 %v356, 256
        %v359 = vpop.permute.xlu0 %358
        %v360 = vlaneseq
        %v361 = vshrl.u32 %v360, 7
        %v362 = vsub.s32 3, %v361
        %v363 = vrot.slane %v335, %v362
        %365 = vbcast.lane.b32.xlu0 %v363, 256
        %v366 = vpop.permute.xlu0 %365
        %v367 = vlaneseq
        %v368 = vshrl.u32 %v367, 7
        %v369 = vsub.s32 4, %v368
        %v370 = vrot.slane %v335, %v369
        %372 = vbcast.lane.b32.xlu0 %v370, 256
        %v373 = vpop.permute.xlu0 %372
        %v374 = vlaneseq
        %v375 = vshrl.u32 %v374, 7
        %v376 = vsub.s32 5, %v375
        %v377 = vrot.slane %v335, %v376
        %379 = vbcast.lane.b32.xlu0 %v377, 256
        %v380 = vpop.permute.xlu0 %379
        %v381 = vlaneseq
        %v382 = vshrl.u32 %v381, 7
        %v383 = vsub.s32 6, %v382
        %v384 = vrot.slane %v335, %v383
        %386 = vbcast.lane.b32.xlu0 %v384, 256
        %v387 = vpop.permute.xlu0 %386
        %v388 = vlaneseq
        %v389 = vshrl.u32 %v388, 7
        %v390 = vsub.s32 7, %v389
        %v391 = vrot.slane %v335, %v390
        %393 = vbcast.lane.b32.xlu0 %v391, 256
        %v394 = vpop.permute.xlu0 %393
        %vm395 = vcmp.eq.s32.totalorder %v345, %v338
        %vm396 = vcmp.eq.s32.totalorder %v352, %v338
        %vm397 = vcmp.eq.s32.totalorder %v359, %v338
        %vm398 = vcmp.eq.s32.totalorder %v366, %v338
        %vm399 = vcmp.eq.s32.totalorder %v373, %v338
        %vm400 = vcmp.eq.s32.totalorder %v380, %v338
        %vm401 = vcmp.eq.s32.totalorder %v387, %v338
        %vm402 = vcmp.eq.s32.totalorder %v394, %v338
        %v403 = vlaneseq
        %v404 = vshrl.u32 %v403, 7
        %v405 = vsub.s32 0, %v404
        %v406 = vrot.slane %v336, %v405
        %408 = vbcast.lane.b32.xlu0 %v406, 256
        %v409 = vpop.permute.xlu0 %408
        %v410 = vlaneseq
        %v411 = vshrl.u32 %v410, 7
        %v412 = vsub.s32 1, %v411
        %v413 = vrot.slane %v336, %v412
        %415 = vbcast.lane.b32.xlu0 %v413, 256
        %v416 = vpop.permute.xlu0 %415
        %v417 = vlaneseq
        %v418 = vshrl.u32 %v417, 7
        %v419 = vsub.s32 2, %v418
        %v420 = vrot.slane %v336, %v419
        %422 = vbcast.lane.b32.xlu0 %v420, 256
        %v423 = vpop.permute.xlu0 %422
        %v424 = vlaneseq
        %v425 = vshrl.u32 %v424, 7
        %v426 = vsub.s32 3, %v425
        %v427 = vrot.slane %v336, %v426
        %429 = vbcast.lane.b32.xlu0 %v427, 256
        %v430 = vpop.permute.xlu0 %429
        %v431 = vlaneseq
        %v432 = vshrl.u32 %v431, 7
        %v433 = vsub.s32 4, %v432
        %v434 = vrot.slane %v336, %v433
        %436 = vbcast.lane.b32.xlu0 %v434, 256
        %v437 = vpop.permute.xlu0 %436
        %v438 = vlaneseq
        %v439 = vshrl.u32 %v438, 7
        %v440 = vsub.s32 5, %v439
        %v441 = vrot.slane %v336, %v440
        %443 = vbcast.lane.b32.xlu0 %v441, 256
        %v444 = vpop.permute.xlu0 %443
        %v445 = vlaneseq
        %v446 = vshrl.u32 %v445, 7
        %v447 = vsub.s32 6, %v446
        %v448 = vrot.slane %v336, %v447
        %450 = vbcast.lane.b32.xlu0 %v448, 256
        %v451 = vpop.permute.xlu0 %450
        %v452 = vlaneseq
        %v453 = vshrl.u32 %v452, 7
        %v454 = vsub.s32 7, %v453
        %v455 = vrot.slane %v336, %v454
        %457 = vbcast.lane.b32.xlu0 %v455, 256
        %v458 = vpop.permute.xlu0 %457
        %v459 = vsel %vm395, %v409, 0.0
        %v460 = vsel %vm396, %v416, 0.0
        %v461 = vsel %vm397, %v423, 0.0
        %v462 = vsel %vm398, %v430, 0.0
        %v463 = vsel %vm399, %v437, 0.0
        %v464 = vsel %vm400, %v444, 0.0
        %v465 = vsel %vm401, %v451, 0.0
        %v466 = vsel %vm402, %v458, 0.0
        %v467 = vrot.slane %v459, 4
        %v468 = vadd.f32 %v459, %v467
        %v469 = vrot.slane %v468, 2
        %v470 = vadd.f32 %v468, %v469
        %v471 = vrot.slane %v470, 1
        %v472 = vadd.f32 %v470, %v471
        %v473 = vrot.slane %v460, 4
        %v474 = vadd.f32 %v460, %v473
        %v475 = vrot.slane %v474, 2
        %v476 = vadd.f32 %v474, %v475
        %v477 = vrot.slane %v476, 1
        %v478 = vadd.f32 %v476, %v477
        %v479 = vrot.slane %v461, 4
        %v480 = vadd.f32 %v461, %v479
        %v481 = vrot.slane %v480, 2
        %v482 = vadd.f32 %v480, %v481
        %v483 = vrot.slane %v482, 1
        %v484 = vadd.f32 %v482, %v483
        %v485 = vrot.slane %v462, 4
        %v486 = vadd.f32 %v462, %v485
        %v487 = vrot.slane %v486, 2
        %v488 = vadd.f32 %v486, %v487
        %v489 = vrot.slane %v488, 1
        %v490 = vadd.f32 %v488, %v489
        %v491 = vrot.slane %v463, 4
        %v492 = vadd.f32 %v463, %v491
        %v493 = vrot.slane %v492, 2
        %v494 = vadd.f32 %v492, %v493
        %v495 = vrot.slane %v494, 1
        %v496 = vadd.f32 %v494, %v495
        %v497 = vrot.slane %v464, 4
        %v498 = vadd.f32 %v464, %v497
        %v499 = vrot.slane %v498, 2
        %v500 = vadd.f32 %v498, %v499
        %v501 = vrot.slane %v500, 1
        %v502 = vadd.f32 %v500, %v501
        %v503 = vrot.slane %v465, 4
        %v504 = vadd.f32 %v465, %v503
        %v505 = vrot.slane %v504, 2
        %v506 = vadd.f32 %v504, %v505
        %v507 = vrot.slane %v506, 1
        %v508 = vadd.f32 %v506, %v507
        %v509 = vrot.slane %v466, 4
        %v510 = vadd.f32 %v466, %v509
        %v511 = vrot.slane %v510, 2
        %v512 = vadd.f32 %v510, %v511
        %v513 = vrot.slane %v512, 1
        %v514 = vadd.f32 %v512, %v513
        %v515 = vld [vmem:[%s3] sm:$0xff]
        %v516 = vld [vmem:[%s3 + $0x8] sm:$0xff]
        %v517 = vld [vmem:[%s3 + $0x10] sm:$0xff]
        %v518 = vld [vmem:[%s3 + $0x18] sm:$0xff]
        %v519 = vld [vmem:[%s3 + $0x20] sm:$0xff]
        %v520 = vld [vmem:[%s3 + $0x28] sm:$0xff]
        %v521 = vld [vmem:[%s3 + $0x30] sm:$0xff]
        %v522 = vld [vmem:[%s3 + $0x38] sm:$0xff]
        %v523 = vld [vmem:[%s3 + $0x40] sm:$0xff]
        %v524 = vld [vmem:[%s3 + $0x48] sm:$0xff]
        %v525 = vld [vmem:[%s3 + $0x50] sm:$0xff]
        %v526 = vld [vmem:[%s3 + $0x58] sm:$0xff]
        %v527 = vld [vmem:[%s3 + $0x60] sm:$0xff]
        %v528 = vld [vmem:[%s3 + $0x68] sm:$0xff]
        %v529 = vld [vmem:[%s3 + $0x70] sm:$0xff]
        %v530 = vld [vmem:[%s3 + $0x78] sm:$0xff]
        %vm539 = vcmask 1041409
        %v540 = vsel %vm539, %v478, %v472
        %vm541 = vcmask 1042434
        %v542 = vsel %vm541, %v484, %v540
        %vm543 = vcmask 1043459
        %v544 = vsel %vm543, %v490, %v542
        %vm545 = vcmask 1044484
        %v546 = vsel %vm545, %v496, %v544
        %vm547 = vcmask 1045509
        %v548 = vsel %vm547, %v502, %v546
        %vm549 = vcmask 1046534
        %v550 = vsel %vm549, %v508, %v548
        %vm551 = vcmask 1047559
        %v552 = vsel %vm551, %v514, %v550
        %554 = vmatprep.subr.mxu0 0.0
        %555 = vmatpush1.msra.mxu0 %v515
        %556 = vmatprep.subr.mxu0 0.0
        %557 = vmatpush1.msra.mxu0 %v516
        %558 = vmatprep.subr.mxu0 0.0
        %559 = vmatpush1.msra.mxu0 %v517
        %560 = vmatprep.subr.mxu0 0.0
        %561 = vmatpush1.msra.mxu0 %v518
        %562 = vmatprep.subr.mxu0 0.0
        %563 = vmatpush1.msra.mxu0 %v519
        %564 = vmatprep.subr.mxu0 0.0
        %565 = vmatpush1.msra.mxu0 %v520
        %566 = vmatprep.subr.mxu0 0.0
        %567 = vmatpush1.msra.mxu0 %v521
        %568 = vmatprep.subr.mxu0 0.0
        %569 = vmatpush1.msra.mxu0 %v522
        %570 = vmatprep.subr.mxu0 0.0
        %571 = vmatpush1.msra.mxu0 %v523
        %572 = vmatprep.subr.mxu0 0.0
        %573 = vmatpush1.msra.mxu0 %v524
        %574 = vmatprep.subr.mxu0 0.0
        %575 = vmatpush1.msra.mxu0 %v525
        %576 = vmatprep.subr.mxu0 0.0
        %577 = vmatpush1.msra.mxu0 %v526
        %578 = vmatprep.subr.mxu0 0.0
        %579 = vmatpush1.msra.mxu0 %v527
        %580 = vmatprep.subr.mxu0 0.0
        %581 = vmatpush1.msra.mxu0 %v528
        %582 = vmatprep.subr.mxu0 0.0
        %583 = vmatpush1.msra.mxu0 %v529
        %584 = vmatprep.subr.mxu0 0.0
        %585 = vmatpush1.msra.mxu0 %v530
        %586 = vmatprep.subr.mxu0 0.0
        %587 = vmatpush1.msra.mxu0 0.0
        %588 = vmatprep.subr.mxu0 0.0
        %589 = vmatpush1.msra.mxu0 0.0
        %590 = vmatprep.subr.mxu0 0.0
        %591 = vmatpush1.msra.mxu0 0.0
        %592 = vmatprep.subr.mxu0 0.0
        %593 = vmatpush1.msra.mxu0 0.0
        %594 = vmatprep.subr.mxu0 0.0
        %595 = vmatpush1.msra.mxu0 0.0
        %596 = vmatprep.subr.mxu0 0.0
        %597 = vmatpush1.msra.mxu0 0.0
        %598 = vmatprep.subr.mxu0 0.0
        %599 = vmatpush1.msra.mxu0 0.0
        %600 = vmatprep.subr.mxu0 0.0
        %601 = vmatpush1.msra.mxu0 0.0
        %602 = vmatprep.subr.mxu0 0.0
        %603 = vmatpush1.msra.mxu0 0.0
        %604 = vmatprep.subr.mxu0 0.0
        %605 = vmatpush1.msra.mxu0 0.0
        %606 = vmatprep.subr.mxu0 0.0
        %607 = vmatpush1.msra.mxu0 0.0
        %608 = vmatprep.subr.mxu0 0.0
        %609 = vmatpush1.msra.mxu0 0.0
        %610 = vmatprep.subr.mxu0 0.0
        %611 = vmatpush1.msra.mxu0 0.0
        %612 = vmatprep.subr.mxu0 0.0
        %613 = vmatpush1.msra.mxu0 0.0
        %614 = vmatprep.subr.mxu0 0.0
        %615 = vmatpush1.msra.mxu0 0.0
        %616 = vmatprep.subr.mxu0 0.0
        %617 = vmatpush1.msra.mxu0 0.0
        %618 = vmatprep.mubr.f32.mxu0 0.0
        %619 = vmatmul.mubr.f32.gmra.mrb[0].mxu0 %v552
        %v620 = vpop.f32.mrb[0].mxu0
        %v621 = vadd.f32 0.0, %v620
        %v622 = vpop.f32.mrb[0].mxu0
        %623 = vdwg.mxu0
        %v624 = vmax.f32 %v621, 1.0
        %v625 = vrcp.pop %v624
        %627 = vset.pattern.permute.xlu0 32
        %628 = vperm.xlu0 %627, %v625
        %v629 = vpop.permute.xlu0 %628
        %v631 = vmul.f32 %v621, %v629
        %v632 = vld [vmem:[%s4] sm:$0xff]
        %v633 = vld [vmem:[%s4 + $0x8] sm:$0xff]
        %v634 = vld [vmem:[%s4 + $0x10] sm:$0xff]
        %v635 = vld [vmem:[%s4 + $0x18] sm:$0xff]
        %v636 = vld [vmem:[%s4 + $0x20] sm:$0xff]
        %v637 = vld [vmem:[%s4 + $0x28] sm:$0xff]
        %v638 = vld [vmem:[%s4 + $0x30] sm:$0xff]
        %v639 = vld [vmem:[%s4 + $0x38] sm:$0xff]
        %vm640 = vcmask 523264
        %v642 = vsel %vm640, %v631, 0
        %644 = vmatprep.subr.mxu0 0.0
        %645 = vmatpush1.msra.mxu0 %v632
        %646 = vmatprep.subr.mxu0 0.0
        %647 = vmatpush1.msra.mxu0 %v633
        %648 = vmatprep.subr.mxu0 0.0
        %649 = vmatpush1.msra.mxu0 %v634
        %650 = vmatprep.subr.mxu0 0.0
        %651 = vmatpush1.msra.mxu0 %v635
        %652 = vmatprep.subr.mxu0 0.0
        %653 = vmatpush1.msra.mxu0 %v636
        %654 = vmatprep.subr.mxu0 0.0
        %655 = vmatpush1.msra.mxu0 %v637
        %656 = vmatprep.subr.mxu0 0.0
        %657 = vmatpush1.msra.mxu0 %v638
        %658 = vmatprep.subr.mxu0 0.0
        %659 = vmatpush1.msra.mxu0 %v639
        %660 = vmatprep.subr.mxu0 0.0
        %661 = vmatpush1.msra.mxu0 0.0
        %662 = vmatprep.subr.mxu0 0.0
        %663 = vmatpush1.msra.mxu0 0.0
        %664 = vmatprep.subr.mxu0 0.0
        %665 = vmatpush1.msra.mxu0 0.0
        %666 = vmatprep.subr.mxu0 0.0
        %667 = vmatpush1.msra.mxu0 0.0
        %668 = vmatprep.subr.mxu0 0.0
        %669 = vmatpush1.msra.mxu0 0.0
        %670 = vmatprep.subr.mxu0 0.0
        %671 = vmatpush1.msra.mxu0 0.0
        %672 = vmatprep.subr.mxu0 0.0
        %673 = vmatpush1.msra.mxu0 0.0
        %674 = vmatprep.subr.mxu0 0.0
        %675 = vmatpush1.msra.mxu0 0.0
        %676 = vmatprep.subr.mxu0 0.0
        %677 = vmatpush1.msra.mxu0 0.0
        %678 = vmatprep.subr.mxu0 0.0
        %679 = vmatpush1.msra.mxu0 0.0
        %680 = vmatprep.subr.mxu0 0.0
        %681 = vmatpush1.msra.mxu0 0.0
        %682 = vmatprep.subr.mxu0 0.0
        %683 = vmatpush1.msra.mxu0 0.0
        %684 = vmatprep.subr.mxu0 0.0
        %685 = vmatpush1.msra.mxu0 0.0
        %686 = vmatprep.subr.mxu0 0.0
        %687 = vmatpush1.msra.mxu0 0.0
        %688 = vmatprep.subr.mxu0 0.0
        %689 = vmatpush1.msra.mxu0 0.0
        %690 = vmatprep.subr.mxu0 0.0
        %691 = vmatpush1.msra.mxu0 0.0
        %692 = vmatprep.subr.mxu0 0.0
        %693 = vmatpush1.msra.mxu0 0.0
        %694 = vmatprep.subr.mxu0 0.0
        %695 = vmatpush1.msra.mxu0 0.0
        %696 = vmatprep.subr.mxu0 0.0
        %697 = vmatpush1.msra.mxu0 0.0
        %698 = vmatprep.subr.mxu0 0.0
        %699 = vmatpush1.msra.mxu0 0.0
        %700 = vmatprep.subr.mxu0 0.0
        %701 = vmatpush1.msra.mxu0 0.0
        %702 = vmatprep.subr.mxu0 0.0
        %703 = vmatpush1.msra.mxu0 0.0
        %704 = vmatprep.subr.mxu0 0.0
        %705 = vmatpush1.msra.mxu0 0.0
        %706 = vmatprep.subr.mxu0 0.0
        %707 = vmatpush1.msra.mxu0 0.0
        %708 = vmatprep.mubr.f32.mxu0 0.0
        %709 = vmatmul.mubr.f32.gmra.mrb[0].mxu0 %v642
        %v710 = vpop.f32.mrb[0].mxu0
        %v711 = vadd.f32 0.0, %v710
        %v712 = vpop.f32.mrb[0].mxu0
        %713 = vdwg.mxu0
        %v714 = vtanh.pop %v711
        %v715 = vld [vmem:[%s334] sm:$0xff]
        %717 = vrot.lane.b32.xlu0 %v715, 32
        %v718 = vpop.permute.xlu0 %717
        %vm720 = vcmask 261120
        %v721 = vsel %vm720, %v714, %v718
        %v722 = vld [vmem:[%s5] sm:$0xff]
        %v723 = vld [vmem:[%s5 + $0x8] sm:$0xff]
        %v724 = vld [vmem:[%s5 + $0x10] sm:$0xff]
        %v725 = vld [vmem:[%s5 + $0x18] sm:$0xff]
        %v726 = vld [vmem:[%s5 + $0x20] sm:$0xff]
        %v727 = vld [vmem:[%s5 + $0x28] sm:$0xff]
        %v728 = vld [vmem:[%s5 + $0x30] sm:$0xff]
        %v729 = vld [vmem:[%s5 + $0x38] sm:$0xff]
        %v731 = vsel %vm640, %v721, 0
        %733 = vmatprep.subr.mxu0 0.0
        %734 = vmatpush1.msra.mxu0 %v722
        %735 = vmatprep.subr.mxu0 0.0
        %736 = vmatpush1.msra.mxu0 %v723
        %737 = vmatprep.subr.mxu0 0.0
        %738 = vmatpush1.msra.mxu0 %v724
        %739 = vmatprep.subr.mxu0 0.0
        %740 = vmatpush1.msra.mxu0 %v725
        %741 = vmatprep.subr.mxu0 0.0
        %742 = vmatpush1.msra.mxu0 %v726
        %743 = vmatprep.subr.mxu0 0.0
        %744 = vmatpush1.msra.mxu0 %v727
        %745 = vmatprep.subr.mxu0 0.0
        %746 = vmatpush1.msra.mxu0 %v728
        %747 = vmatprep.subr.mxu0 0.0
        %748 = vmatpush1.msra.mxu0 %v729
        %749 = vmatprep.subr.mxu0 0.0
        %750 = vmatpush1.msra.mxu0 0.0
        %751 = vmatprep.subr.mxu0 0.0
        %752 = vmatpush1.msra.mxu0 0.0
        %753 = vmatprep.subr.mxu0 0.0
        %754 = vmatpush1.msra.mxu0 0.0
        %755 = vmatprep.subr.mxu0 0.0
        %756 = vmatpush1.msra.mxu0 0.0
        %757 = vmatprep.subr.mxu0 0.0
        %758 = vmatpush1.msra.mxu0 0.0
        %759 = vmatprep.subr.mxu0 0.0
        %760 = vmatpush1.msra.mxu0 0.0
        %761 = vmatprep.subr.mxu0 0.0
        %762 = vmatpush1.msra.mxu0 0.0
        %763 = vmatprep.subr.mxu0 0.0
        %764 = vmatpush1.msra.mxu0 0.0
        %765 = vmatprep.subr.mxu0 0.0
        %766 = vmatpush1.msra.mxu0 0.0
        %767 = vmatprep.subr.mxu0 0.0
        %768 = vmatpush1.msra.mxu0 0.0
        %769 = vmatprep.subr.mxu0 0.0
        %770 = vmatpush1.msra.mxu0 0.0
        %771 = vmatprep.subr.mxu0 0.0
        %772 = vmatpush1.msra.mxu0 0.0
        %773 = vmatprep.subr.mxu0 0.0
        %774 = vmatpush1.msra.mxu0 0.0
        %775 = vmatprep.subr.mxu0 0.0
        %776 = vmatpush1.msra.mxu0 0.0
        %777 = vmatprep.subr.mxu0 0.0
        %778 = vmatpush1.msra.mxu0 0.0
        %779 = vmatprep.subr.mxu0 0.0
        %780 = vmatpush1.msra.mxu0 0.0
        %781 = vmatprep.subr.mxu0 0.0
        %782 = vmatpush1.msra.mxu0 0.0
        %783 = vmatprep.subr.mxu0 0.0
        %784 = vmatpush1.msra.mxu0 0.0
        %785 = vmatprep.subr.mxu0 0.0
        %786 = vmatpush1.msra.mxu0 0.0
        %787 = vmatprep.subr.mxu0 0.0
        %788 = vmatpush1.msra.mxu0 0.0
        %789 = vmatprep.subr.mxu0 0.0
        %790 = vmatpush1.msra.mxu0 0.0
        %791 = vmatprep.subr.mxu0 0.0
        %792 = vmatpush1.msra.mxu0 0.0
        %793 = vmatprep.subr.mxu0 0.0
        %794 = vmatpush1.msra.mxu0 0.0
        %795 = vmatprep.subr.mxu0 0.0
        %796 = vmatpush1.msra.mxu0 0.0
        %797 = vmatprep.mubr.f32.mxu0 0.0
        %798 = vmatmul.mubr.f32.gmra.mrb[0].mxu0 %v731
        %v799 = vpop.f32.mrb[0].mxu0
        %v800 = vadd.f32 0.0, %v799
        %v801 = vpop.f32.mrb[0].mxu0
        %802 = vdwg.mxu0
        %v803 = vmax.f32 %v800, 0.0
        %v804 = vld [vmem:[%s6] sm:$0xff]
        %v805 = vld [vmem:[%s6 + $0x8] sm:$0xff]
        %v806 = vld [vmem:[%s6 + $0x10] sm:$0xff]
        %v807 = vld [vmem:[%s6 + $0x18] sm:$0xff]
        %v808 = vld [vmem:[%s6 + $0x20] sm:$0xff]
        %v809 = vld [vmem:[%s6 + $0x28] sm:$0xff]
        %v810 = vld [vmem:[%s6 + $0x30] sm:$0xff]
        %v811 = vld [vmem:[%s6 + $0x38] sm:$0xff]
        %v812 = vld [vmem:[%s6 + $0x40] sm:$0xff]
        %v813 = vld [vmem:[%s6 + $0x48] sm:$0xff]
        %v814 = vld [vmem:[%s6 + $0x50] sm:$0xff]
        %v815 = vld [vmem:[%s6 + $0x58] sm:$0xff]
        %v816 = vld [vmem:[%s6 + $0x60] sm:$0xff]
        %v817 = vld [vmem:[%s6 + $0x68] sm:$0xff]
        %v818 = vld [vmem:[%s6 + $0x70] sm:$0xff]
        %v819 = vld [vmem:[%s6 + $0x78] sm:$0xff]
        %v820 = vld [vmem:[%s7] sm:$0x1]
        %v822 = vlaneseq
        %v823 = vshrl.u32 %v822, 7
        %v824 = vsub.s32 0, %v823
        %v825 = vrot.slane %v820, %v824
        %827 = vmatprep.subr.mxu0 0.0
        %828 = vmatpush1.msra.mxu0 %v804
        %829 = vmatprep.subr.mxu0 0.0
        %830 = vmatpush1.msra.mxu0 %v805
        %831 = vmatprep.subr.mxu0 0.0
        %832 = vmatpush1.msra.mxu0 %v806
        %833 = vmatprep.subr.mxu0 0.0
        %834 = vmatpush1.msra.mxu0 %v807
        %835 = vmatprep.subr.mxu0 0.0
        %836 = vmatpush1.msra.mxu0 %v808
        %837 = vmatprep.subr.mxu0 0.0
        %838 = vmatpush1.msra.mxu0 %v809
        %839 = vmatprep.subr.mxu0 0.0
        %840 = vmatpush1.msra.mxu0 %v810
        %841 = vmatprep.subr.mxu0 0.0
        %842 = vmatpush1.msra.mxu0 %v811
        %843 = vmatprep.subr.mxu0 0.0
        %844 = vmatpush1.msra.mxu0 %v812
        %845 = vmatprep.subr.mxu0 0.0
        %846 = vmatpush1.msra.mxu0 %v813
        %847 = vmatprep.subr.mxu0 0.0
        %848 = vmatpush1.msra.mxu0 %v814
        %849 = vmatprep.subr.mxu0 0.0
        %850 = vmatpush1.msra.mxu0 %v815
        %851 = vmatprep.subr.mxu0 0.0
        %852 = vmatpush1.msra.mxu0 %v816
        %853 = vmatprep.subr.mxu0 0.0
        %854 = vmatpush1.msra.mxu0 %v817
        %855 = vmatprep.subr.mxu0 0.0
        %856 = vmatpush1.msra.mxu0 %v818
        %857 = vmatprep.subr.mxu0 0.0
        %858 = vmatpush1.msra.mxu0 %v819
        %859 = vmatprep.subr.mxu0 0.0
        %860 = vmatpush1.msra.mxu0 0.0
        %861 = vmatprep.subr.mxu0 0.0
        %862 = vmatpush1.msra.mxu0 0.0
        %863 = vmatprep.subr.mxu0 0.0
        %864 = vmatpush1.msra.mxu0 0.0
        %865 = vmatprep.subr.mxu0 0.0
        %866 = vmatpush1.msra.mxu0 0.0
        %867 = vmatprep.subr.mxu0 0.0
        %868 = vmatpush1.msra.mxu0 0.0
        %869 = vmatprep.subr.mxu0 0.0
        %870 = vmatpush1.msra.mxu0 0.0
        %871 = vmatprep.subr.mxu0 0.0
        %872 = vmatpush1.msra.mxu0 0.0
        %873 = vmatprep.subr.mxu0 0.0
        %874 = vmatpush1.msra.mxu0 0.0
        %875 = vmatprep.subr.mxu0 0.0
        %876 = vmatpush1.msra.mxu0 0.0
        %877 = vmatprep.subr.mxu0 0.0
        %878 = vmatpush1.msra.mxu0 0.0
        %879 = vmatprep.subr.mxu0 0.0
        %880 = vmatpush1.msra.mxu0 0.0
        %881 = vmatprep.subr.mxu0 0.0
        %882 = vmatpush1.msra.mxu0 0.0
        %883 = vmatprep.subr.mxu0 0.0
        %884 = vmatpush1.msra.mxu0 0.0
        %885 = vmatprep.subr.mxu0 0.0
        %886 = vmatpush1.msra.mxu0 0.0
        %887 = vmatprep.subr.mxu0 0.0
        %888 = vmatpush1.msra.mxu0 0.0
        %889 = vmatprep.subr.mxu0 0.0
        %890 = vmatpush1.msra.mxu0 0.0
        %891 = vmatprep.mubr.f32.mxu0 0.0
        %892 = vmatmul.mubr.f32.gmra.mrb[0].mxu0 %v803
        %v893 = vpop.f32.mrb[0].mxu0
        %v894 = vadd.f32 %v825, %v893
        %v895 = vpop.f32.mrb[0].mxu0
        %896 = vdwg.mxu0
        %897 = vst [vmem:[%s322] sm:$0xff] %v894
        %s898 = sand.u32 %s213, 1
        %s899 = scalar_lea.sflag [#allocation3], %s898
        %s900 = sand.u32 %s213, 1
        %s901 = smul.addr %s900, 8
        %s902 = scalar_lea.vmem [#allocation2], %s901
        // Predicated region
        $region53: #{tpu_custom_call.1} parent=51 // pred_check
          %p903 = pneg %p223
        $region54: #{tpu_custom_call.1} parent=51 // pred_check_branch
          %905 = sbr.rel (%p903) target = $region56
        $region55: #{tpu_custom_call.1} parent=51 // pred_region
          %s907 = ssub.s32 128, 128
          %908 = vsyncadd %s899, %s907
          %s909 = smul.addr %s22, 128
          %s910 = scalar_lea.hbm %s8, %s909
          %s912 = sshll.u32 %s902, 4
          %s913 = int_to_ptr.vmem [resolvable:$true] %s912
          %915 = dma.vmem_to_hbm [thread:$0]  %s913, 128, %s910, %s899
        $region56: #{tpu_custom_call.1} parent=51 // pred_fallthru
          _
      $region52: #{tpu_custom_call.1} parent=5 // pred_fallthru
        _
      %p916 = scmp.le.s32.totalorder 2, %s17
      // Predicated region
      $region57: #{tpu_custom_call.1} parent=5 // pred_check
        %p917 = pneg %p916
      $region58: #{tpu_custom_call.1} parent=5 // pred_check_branch
        %919 = sbr.rel (%p917) target = $region60
      $region59: #{tpu_custom_call.1} parent=5 // pred_region
        %s920 = ssub.s32 %s17, 2
        // Predicated region
        $region61: #{tpu_custom_call.1} parent=59 // pred_check
          %p921 = pneg %p229
        $region62: #{tpu_custom_call.1} parent=59 // pred_check_branch
          %923 = sbr.rel (%p921) target = $region64
        $region63: #{tpu_custom_call.1} parent=59 // pred_region
          %s924 = sand.u32 %s214, 1
          %s925 = scalar_lea.sflag [#allocation3], %s924
          %s926 = sand.u32 %s214, 1
          %s927 = smul.addr %s926, 8
          %s928 = scalar_lea.vmem [#allocation2], %s927
          %929 = dma.done %s925, 128
        $region64: #{tpu_custom_call.1} parent=59 // pred_fallthru
          _
      $region60: #{tpu_custom_call.1} parent=5 // pred_fallthru
        _
    $region6: #{tpu_custom_call.1} parent=1 // loop_footer
      %s21 = sadd.s32 1, %s17
    $region7: #{tpu_custom_call.1} parent=1 // loop_footer_branch
      %16 = sbr.rel target = $region3
    $region8: #{tpu_custom_call.1} parent=1 // loop_exit
      _
    %930 = vsyncpa [#allocation3], 1
    %s931 = scalar_lea.sflag [#allocation3], 1
    %932 = vsyncpa %s931, 1

</llo_original>
